<compile_context>
chip_gen: v5e
topology: v5e:2x2
jax: 0.10.0
libtpu: 0.0.40
codegen_flags: <defaults>
</compile_context>

<pallas_src>
import functools

import jax
import jax.numpy as jnp
import numpy as np
from jax.experimental import pallas as pl
from jax.experimental.pallas import tpu as pltpu


# ----------------------------------------------------------------------------
# helpers
# ----------------------------------------------------------------------------
def _compiler_params(semantics, live_block_bytes):
    # Explicit VMEM budget: double-buffered streaming blocks + weights + slack,
    # kept well under v7x's 64 MiB / TensorCore physical VMEM.
    budget = int(min(48 * 1024 * 1024,
                     max(8 * 1024 * 1024, 2 * live_block_bytes + (2 << 20))))
    return pltpu.CompilerParams(dimension_semantics=semantics,
                                vmem_limit_bytes=budget)


def _pick_hw_tile(HW, cap_elems):
    """Largest lane-aligned (multiple of 128) divisor of HW that fits cap_elems."""
    if HW <= cap_elems:
        return HW
    cap = (cap_elems // 128) * 128
    for t in range(cap, 127, -128):
        if HW % t == 0:
            return t
    return HW  # no lane-aligned divisor -> fall back to one tile per batch


def _pick_batch_tile(B, per_batch_bytes, target_bytes):
    """Largest divisor of B whose (BB, C, HW) block stays under target_bytes."""
    bb = int(max(1, min(B, target_bytes // max(1, per_batch_bytes))))
    while B % bb:
        bb -= 1
    return bb


# ----------------------------------------------------------------------------
# fully fused kernel: pool + shared MLP + sigmoid gate + scale, one pass over x
# (processes BB batches per grid step; MLP is batched over all pooled rows)
# ----------------------------------------------------------------------------
def _cam_fused_kernel(inv_hw, bb, x_ref, w1t_ref, b1_ref, w2t_ref, b2_ref, o_ref):
    x = x_ref[...]                                                 # (BB, C, HW)
    xf = x.astype(jnp.float32)
    mx = jnp.max(xf, axis=2)                                       # (BB, C)
    av = jnp.sum(xf, axis=2) * inv_hw                              # (BB, C)
    pooled = jnp.concatenate([mx, av], axis=0)                     # (2*BB, C) lane-dense
    # shared MLP applied to all pooled rows with one pair of MXU matmuls
    h = jnp.maximum(
        jnp.dot(pooled, w1t_ref[...], preferred_element_type=jnp.float32)
        + b1_ref[...], 0.0)                                        # (2*BB, C/r)
    z = (jnp.dot(h, w2t_ref[...], preferred_element_type=jnp.float32)
         + b2_ref[...])                                            # (2*BB, C)
    att = jax.nn.sigmoid(z[:bb] + z[bb:])                          # (BB, C)
    o_ref[...] = (xf * att[:, :, None]).astype(o_ref.dtype)


# ----------------------------------------------------------------------------
# streaming path (for large HW): pass 1 = tiled reduction + MLP -> attention
# ----------------------------------------------------------------------------
def _cam_reduce_kernel(inv_hw, x_ref, w1_ref, b1_ref, w2_ref, b2_ref,
                       att_ref, mx_sc, sm_sc):
    t = pl.program_id(1)

    @pl.when(t == 0)
    def _():
        mx_sc[...] = jnp.full(mx_sc.shape, -jnp.inf, dtype=mx_sc.dtype)
        sm_sc[...] = jnp.zeros(sm_sc.shape, dtype=sm_sc.dtype)

    x = x_ref[0]                                                   # (C, tile_hw)
    mx_sc[...] = jnp.maximum(
        mx_sc[...], jnp.max(x, axis=1, keepdims=True).astype(jnp.float32))
    sm_sc[...] = sm_sc[...] + jnp.sum(x.astype(jnp.float32), axis=1, keepdims=True)

    @pl.when(t == pl.num_programs(1) - 1)
    def _():
        pooled = jnp.concatenate([mx_sc[...], sm_sc[...] * inv_hw], axis=1)  # (C, 2)
        h = jnp.maximum(
            jnp.dot(w1_ref[...], pooled, preferred_element_type=jnp.float32)
            + b1_ref[...], 0.0)
        z = (jnp.dot(w2_ref[...], h, preferred_element_type=jnp.float32)
             + b2_ref[...])
        att_ref[0] = jax.nn.sigmoid(z[:, 0:1] + z[:, 1:2])                   # (C, 1)


# pass 2 = tiled elementwise gate (pure mem-bound stream)
def _cam_apply_kernel(x_ref, att_ref, o_ref):
    o_ref[0] = (x_ref[0] * att_ref[0]).astype(o_ref.dtype)


# ----------------------------------------------------------------------------
# wrapper
# ----------------------------------------------------------------------------
def cam_forward(x_nchw, params, *, max_fused_bytes=4 << 20, max_tile_bytes=2 << 20):
    """CAM forward: sigmoid(MLP(maxpool(x)) + MLP(avgpool(x))) * x, NCHW in/out."""
    B, C, H, W = x_nchw.shape
    HW = H * W
    x = x_nchw.reshape(B, C, HW)          # free reshape, channels on sublanes
    w1, b1, w2, b2 = params["w1"], params["b1"], params["w2"], params["b2"]
    CH = w1.shape[0]
    itemsize = x.dtype.itemsize
    inv_hw = 1.0 / HW
    per_batch_bytes = C * HW * itemsize

    if per_batch_bytes <= max_fused_bytes:
        # single fused pass: x read once, gated output written once.
        # Tile multiple batches per grid step to amortize per-step overhead.
        BB = _pick_batch_tile(B, per_batch_bytes, max_fused_bytes)
        block_bytes = BB * per_batch_bytes
        # row-form weights (transposed once here, tiny) so the in-kernel MLP runs
        # on a lane-dense (2*BB, C) pooled slab with C on the 128-lane axis.
        w1t = jnp.transpose(w1)           # (C, CH)
        w2t = jnp.transpose(w2)           # (CH, C)
        b1r = b1.reshape(1, CH)
        b2r = b2.reshape(1, C)

        out = pl.pallas_call(
            functools.partial(_cam_fused_kernel, inv_hw, BB),
            out_shape=jax.ShapeDtypeStruct((B, C, HW), x.dtype),
            grid=(B // BB,),
            in_specs=[pl.BlockSpec((BB, C, HW), lambda b: (b, 0, 0)),
                      pl.BlockSpec((C, CH), lambda b: (0, 0)),
                      pl.BlockSpec((1, CH), lambda b: (0, 0)),
                      pl.BlockSpec((CH, C), lambda b: (0, 0)),
                      pl.BlockSpec((1, C), lambda b: (0, 0))],
            out_specs=pl.BlockSpec((BB, C, HW), lambda b: (b, 0, 0)),
            compiler_params=_compiler_params(
                ("parallel",), 2 * block_bytes + BB * C * HW * 4),
        )(x, w1t, b1r, w2t, b2r)
    else:
        # two-pass streaming path for big feature maps: HW tiled on the lane axis.
        # Weights kept in the PyTorch (out, in) layout -> natural column-form MLP.
        weight_specs = [
            pl.BlockSpec((CH, C), lambda b, t: (0, 0)),
            pl.BlockSpec((CH, 1), lambda b, t: (0, 0)),
            pl.BlockSpec((C, CH), lambda b, t: (0, 0)),
            pl.BlockSpec((C, 1), lambda b, t: (0, 0)),
        ]
        tile = _pick_hw_tile(HW, max(128, max_tile_bytes // (C * itemsize)))
        T = HW // tile

        att = pl.pallas_call(
            functools.partial(_cam_reduce_kernel, inv_hw),
            out_shape=jax.ShapeDtypeStruct((B, C, 1), jnp.float32),
            grid=(B, T),
            in_specs=[pl.BlockSpec((1, C, tile), lambda b, t: (b, 0, t))] + weight_specs,
            out_specs=pl.BlockSpec((1, C, 1), lambda b, t: (b, 0, 0)),
            scratch_shapes=[pltpu.VMEM((C, 1), jnp.float32),
                            pltpu.VMEM((C, 1), jnp.float32)],
            compiler_params=_compiler_params(("parallel", "arbitrary"),
                                             C * tile * itemsize),
        )(x, w1, b1, w2, b2)

        out = pl.pallas_call(
            _cam_apply_kernel,
            out_shape=jax.ShapeDtypeStruct((B, C, HW), x.dtype),
            grid=(B, T),
            in_specs=[pl.BlockSpec((1, C, tile), lambda b, t: (b, 0, t)),
                      pl.BlockSpec((1, C, 1), lambda b, t: (b, 0, 0))],
            out_specs=pl.BlockSpec((1, C, tile), lambda b, t: (b, 0, t)),
            compiler_params=_compiler_params(("parallel", "parallel"),
                                             2 * C * tile * itemsize),
        )(x, att)

    return out.reshape(B, C, H, W)


# ----------------------------------------------------------------------------
# pure-JAX reference mirroring the PyTorch module (weights in torch (out,in) layout)
# ----------------------------------------------------------------------------
def ref_cam(x, p):
    HI = jax.lax.Precision.HIGHEST
    mx = jnp.max(x, axis=(2, 3))                                   # (B, C)
    av = jnp.mean(x, axis=(2, 3))                                  # (B, C)

    def mlp(v):
        h = jnp.maximum(jnp.dot(v, p["w1"].T, precision=HI) + p["b1"][:, 0], 0.0)
        return jnp.dot(h, p["w2"].T, precision=HI) + p["b2"][:, 0]

    att = jax.nn.sigmoid(mlp(mx) + mlp(av))[:, :, None, None]
    return att * x


def make_params(key, C, r):
    CH = C // r
    k = jax.random.split(key, 4)
    return {
        "w1": jax.random.normal(k[0], (CH, C), jnp.float32) / np.sqrt(C),
        "b1": jax.random.normal(k[1], (CH, 1), jnp.float32) * 0.01,
        "w2": jax.random.normal(k[2], (C, CH), jnp.float32) / np.sqrt(CH),
        "b2": jax.random.normal(k[3], (C, 1), jnp.float32) * 0.01,
    }


# ----------------------------------------------------------------------------
if __name__ == "__main__":
    key = jax.random.PRNGKey(0)
    r = 4

    # CAM(channels=128, r=4) as used in yolox, small spatial map
    B, C, H, W = 2, 128, 16, 16
    kx, kp = jax.random.split(key)
    x = jax.random.normal(kx, (B, C, H, W), jnp.float32)
    params = make_params(kp, C, r)

    # fused single-pass path (both batches land in one grid step)
    out_fused = cam_forward(x, params)
    jax.block_until_ready(out_fused)

    # force the tiled two-pass path (HW tile = 128 -> 2 tiles) to exercise it too
    out_tiled = cam_forward(x, params, max_fused_bytes=0, max_tile_bytes=128 * C * 4)
    jax.block_until_ready(out_tiled)

    ref = ref_cam(x, params)
    np.testing.assert_allclose(np.asarray(out_fused), np.asarray(ref),
                               rtol=1e-4, atol=1e-4)
    np.testing.assert_allclose(np.asarray(out_tiled), np.asarray(ref),
                               rtol=1e-4, atol=1e-4)
    assert out_fused.shape == (B, C, H, W)
    assert out_tiled.shape == (B, C, H, W)

    # odd batch exercises the batch-tile divisor logic (BB = 3, single grid step)
    B2, C2, H2, W2 = 3, 64, 8, 8
    x2 = jax.random.normal(jax.random.PRNGKey(1), (B2, C2, H2, W2), jnp.float32)
    p2 = make_params(jax.random.PRNGKey(2), C2, r)
    out2 = cam_forward(x2, p2)
    jax.block_until_ready(out2)
    np.testing.assert_allclose(np.asarray(out2), np.asarray(ref_cam(x2, p2)),
                               rtol=1e-4, atol=1e-4)

    print("KERNEL_OK")
</pallas_src>

<mosaic_0001>
module attributes {stable_mosaic.version = 11 : i64} {
  func.func @_cam_fused_kernel(%arg0: i32, %arg1: memref<2x128x256xf32, #tpu.memory_space<vmem>>, %arg2: memref<128x32xf32, #tpu.memory_space<vmem>>, %arg3: memref<1x32xf32, #tpu.memory_space<vmem>>, %arg4: memref<32x128xf32, #tpu.memory_space<vmem>>, %arg5: memref<1x128xf32, #tpu.memory_space<vmem>>, %arg6: memref<2x128x256xf32, #tpu.memory_space<vmem>>) attributes {dimension_semantics = [#tpu.dimension_semantics<parallel>], iteration_bounds = array<i64: 1>, scalar_prefetch = 0 : i64, scratch_operands = 0 : i64, tpu.core_type = #tpu.core_type<tc>, window_params = [{transform_indices = @transform_0, window_bounds = array<i64: 2, 128, 256>}, {pipeline_mode = #tpu.pipeline_mode<synchronous>, transform_indices = @transform_1, window_bounds = array<i64: 128, 32>}, {pipeline_mode = #tpu.pipeline_mode<synchronous>, transform_indices = @transform_2, window_bounds = array<i64: 1, 32>}, {pipeline_mode = #tpu.pipeline_mode<synchronous>, transform_indices = @transform_3, window_bounds = array<i64: 32, 128>}, {pipeline_mode = #tpu.pipeline_mode<synchronous>, transform_indices = @transform_4, window_bounds = array<i64: 1, 128>}, {transform_indices = @transform_5, window_bounds = array<i64: 2, 128, 256>}]} {
    %c0 = arith.constant 0 : index
    %c0_0 = arith.constant 0 : index
    %c0_1 = arith.constant 0 : index
    %0 = vector.load %arg1[%c0, %c0_0, %c0_1] : memref<2x128x256xf32, #tpu.memory_space<vmem>>, vector<2x128x256xf32>
    %cst = arith.constant dense<0xFF800000> : vector<2x128xf32>
    %1 = vector.multi_reduction <maximumf>, %0, %cst [2] : vector<2x128x256xf32> to vector<2x128xf32>
    %cst_2 = arith.constant dense<0.000000e+00> : vector<2x128xf32>
    %2 = vector.multi_reduction <add>, %0, %cst_2 [2] : vector<2x128x256xf32> to vector<2x128xf32>
    %cst_3 = arith.constant 3.906250e-03 : f32
    %3 = vector.broadcast %cst_3 : f32 to vector<2x128xf32>
    %4 = arith.mulf %2, %3 : vector<2x128xf32>
    %5 = tpu.concatenate %1, %4 in 0 : vector<2x128xf32>, vector<2x128xf32> -> vector<4x128xf32>
    %c0_4 = arith.constant 0 : index
    %c0_5 = arith.constant 0 : index
    %6 = vector.load %arg2[%c0_4, %c0_5] : memref<128x32xf32, #tpu.memory_space<vmem>>, vector<128x32xf32>
    %cst_6 = arith.constant dense<0.000000e+00> : vector<4x32xf32>
    %7 = tpu.matmul %5, %6, %cst_6 {dimension_numbers = #tpu.dot_dimension_numbers<[1], [0], [0], [1], [0, 0, 1, 1], [], []>} : vector<4x128xf32>, vector<128x32xf32>, vector<4x32xf32> -> vector<4x32xf32>
    %c0_7 = arith.constant 0 : index
    %c0_8 = arith.constant 0 : index
    %8 = vector.load %arg3[%c0_7, %c0_8] : memref<1x32xf32, #tpu.memory_space<vmem>>, vector<1x32xf32>
    %9 = vector.broadcast %8 : vector<1x32xf32> to vector<4x32xf32>
    %10 = arith.addf %7, %9 : vector<4x32xf32>
    %cst_9 = arith.constant 0.000000e+00 : f32
    %11 = vector.broadcast %cst_9 : f32 to vector<4x32xf32>
    %12 = arith.maximumf %10, %11 : vector<4x32xf32>
    %c0_10 = arith.constant 0 : index
    %c0_11 = arith.constant 0 : index
    %13 = vector.load %arg4[%c0_10, %c0_11] : memref<32x128xf32, #tpu.memory_space<vmem>>, vector<32x128xf32>
    %cst_12 = arith.constant dense<0.000000e+00> : vector<4x128xf32>
    %14 = tpu.matmul %12, %13, %cst_12 {dimension_numbers = #tpu.dot_dimension_numbers<[1], [0], [0], [1], [0, 0, 1, 1], [], []>} : vector<4x32xf32>, vector<32x128xf32>, vector<4x128xf32> -> vector<4x128xf32>
    %c0_13 = arith.constant 0 : index
    %c0_14 = arith.constant 0 : index
    %15 = vector.load %arg5[%c0_13, %c0_14] : memref<1x128xf32, #tpu.memory_space<vmem>>, vector<1x128xf32>
    %16 = vector.broadcast %15 : vector<1x128xf32> to vector<4x128xf32>
    %17 = arith.addf %14, %16 : vector<4x128xf32>
    %18 = vector.extract_strided_slice %17 {offsets = [0, 0], sizes = [2, 128], strides = [1, 1]} : vector<4x128xf32> to vector<2x128xf32>
    %19 = vector.extract_strided_slice %17 {offsets = [2, 0], sizes = [2, 128], strides = [1, 1]} : vector<4x128xf32> to vector<2x128xf32>
    %20 = arith.addf %18, %19 : vector<2x128xf32>
    %21 = arith.negf %20 : vector<2x128xf32>
    %22 = math.exp %21 : vector<2x128xf32>
    %cst_15 = arith.constant 1.000000e+00 : f32
    %23 = vector.broadcast %cst_15 : f32 to vector<2x128xf32>
    %24 = arith.addf %23, %22 : vector<2x128xf32>
    %25 = arith.divf %23, %24 : vector<2x128xf32>
    %26 = vector.shape_cast %25 : vector<2x128xf32> to vector<2x128x1xf32>
    %27 = vector.broadcast %26 : vector<2x128x1xf32> to vector<2x128x256xf32>
    %28 = arith.mulf %0, %27 : vector<2x128x256xf32>
    %c0_16 = arith.constant 0 : index
    %c0_17 = arith.constant 0 : index
    %c0_18 = arith.constant 0 : index
    %29 = vector.load %arg6[%c0_16, %c0_17, %c0_18] : memref<2x128x256xf32, #tpu.memory_space<vmem>>, vector<2x128x256xf32>
    tpu.vector_store %arg6[%c0_16, %c0_17, %c0_18], %28 {strides = array<i32>} : memref<2x128x256xf32, #tpu.memory_space<vmem>>, vector<2x128x256xf32>,
    return
  }
  func.func @transform_0(%arg0: i32) -> (i32, i32, i32) {
    %c0_i32 = arith.constant 0 : i32
    %c0_i32_0 = arith.constant 0 : i32
    %c0_i32_1 = arith.constant 0 : i32
    return %arg0, %c0_i32, %c0_i32_0 : i32, i32, i32
  }
  func.func @transform_1(%arg0: i32) -> (i32, i32) {
    %c0_i32 = arith.constant 0 : i32
    %c0_i32_0 = arith.constant 0 : i32
    %c0_i32_1 = arith.constant 0 : i32
    return %c0_i32, %c0_i32_0 : i32, i32
  }
  func.func @transform_2(%arg0: i32) -> (i32, i32) {
    %c0_i32 = arith.constant 0 : i32
    %c0_i32_0 = arith.constant 0 : i32
    %c0_i32_1 = arith.constant 0 : i32
    return %c0_i32, %c0_i32_0 : i32, i32
  }
  func.func @transform_3(%arg0: i32) -> (i32, i32) {
    %c0_i32 = arith.constant 0 : i32
    %c0_i32_0 = arith.constant 0 : i32
    %c0_i32_1 = arith.constant 0 : i32
    return %c0_i32, %c0_i32_0 : i32, i32
  }
  func.func @transform_4(%arg0: i32) -> (i32, i32) {
    %c0_i32 = arith.constant 0 : i32
    %c0_i32_0 = arith.constant 0 : i32
    %c0_i32_1 = arith.constant 0 : i32
    return %c0_i32, %c0_i32_0 : i32, i32
  }
  func.func @transform_5(%arg0: i32) -> (i32, i32, i32) {
    %c0_i32 = arith.constant 0 : i32
    %c0_i32_0 = arith.constant 0 : i32
    %c0_i32_1 = arith.constant 0 : i32
    return %arg0, %c0_i32, %c0_i32_0 : i32, i32, i32
  }
}

</mosaic_0001>

<llo_original>
// kernel: tpu_custom_call.1
$region0: #{tpu_custom_call.1}
  #allocation0 [shape = 'u32[]', space=smem, size = 0x4, offset = 0x4, fixed_abs, tag = 'smem constant byte address 0x4 - core index']
  #allocation1 [shape = 'u32[72,128]{1,0:T(1,128)}', space=vmem, size = 0x9000, scoped, tag = 'internal scratch']
  %s0 = inlined_call_operand.hbm [shape: f32[2,128,256], index: 0, kind: input, shape index: {}]
  %s1 = inlined_call_operand.vmem [shape: f32[128,32], index: 1, kind: input, shape index: {}]
  %s2 = inlined_call_operand.vmem [shape: f32[1,32], index: 2, kind: input, shape index: {}]
  %s3 = inlined_call_operand.vmem [shape: f32[32,128], index: 3, kind: input, shape index: {}]
  %s4 = inlined_call_operand.vmem [shape: f32[1,128], index: 4, kind: input, shape index: {}]
  %s5 = inlined_call_operand.hbm [shape: f32[2,128,256], index: 5, kind: output, shape index: {}]
  %s6 = sld [smem:[#allocation0]]
  $region34: #{tpu_custom_call.1} parent=0
    _
  %s8 = ssub.s32 1, %s6
  %s9 = scalar_select 0, %s8, %s6
  $region1: #{tpu_custom_call.1} parent=0
    #allocation2 [shape = 'u8[262144]{0}', space=vmem, size = 0x40000, scoped, tag = 'input window, operand 0, single buffered']
    #allocation3 [shape = 's32[1]{0}', space=sflag, size = 0x4, scoped, tag = 'scoped memory for tpu_custom_call.1']
    #allocation4 [shape = 's32[1]{0}', space=sflag, size = 0x4, scoped, tag = 'scoped memory for tpu_custom_call.1']
    #allocation5 [shape = 'u8[262144]{0}', space=vmem, size = 0x40000, scoped, tag = 'output window, operand 0, single buffered']
    %10 = vsyncpa [#allocation3], 0
    %11 = vsyncpa [#allocation4], 0
    // Predicated region
    $region2: #{tpu_custom_call.1} parent=1 // pred_check
      _
    $region3: #{tpu_custom_call.1} parent=1 // pred_check_branch
      %13 = sbr.rel (0) target = $region5
    $region4: #{tpu_custom_call.1} parent=1 // pred_region
      %15 = vsyncadd [#allocation3], 0
      %s16 = sshll.u32 %s0, 4
      %s17 = int_to_ptr.hbm [resolvable:$true] %s16
      %s18 = sshll.u32 [#allocation2], 4
      %s19 = int_to_ptr.vmem [resolvable:$true] %s18
      %24 = dma.hbm_to_vmem [thread:$0]  %s17, 8192, %s19, [#allocation3], 256, 256, 16
    $region5: #{tpu_custom_call.1} parent=1 // pred_fallthru
      _
    // Predicated region
    $region6: #{tpu_custom_call.1} parent=1 // pred_check
      _
    $region7: #{tpu_custom_call.1} parent=1 // pred_check_branch
      %26 = sbr.rel (0) target = $region9
    $region8: #{tpu_custom_call.1} parent=1 // pred_region
      _
    $region9: #{tpu_custom_call.1} parent=1 // pred_fallthru
      _
    // Predicated region
    $region10: #{tpu_custom_call.1} parent=1 // pred_check
      _
    $region11: #{tpu_custom_call.1} parent=1 // pred_check_branch
      %28 = sbr.rel (0) target = $region13
    $region12: #{tpu_custom_call.1} parent=1 // pred_region
      _
    $region13: #{tpu_custom_call.1} parent=1 // pred_fallthru
      _
    // Predicated region
    $region14: #{tpu_custom_call.1} parent=1 // pred_check
      _
    $region15: #{tpu_custom_call.1} parent=1 // pred_check_branch
      %30 = sbr.rel (0) target = $region17
    $region16: #{tpu_custom_call.1} parent=1 // pred_region
      _
    $region17: #{tpu_custom_call.1} parent=1 // pred_fallthru
      _
    // Predicated region
    $region18: #{tpu_custom_call.1} parent=1 // pred_check
      _
    $region19: #{tpu_custom_call.1} parent=1 // pred_check_branch
      %32 = sbr.rel (0) target = $region21
    $region20: #{tpu_custom_call.1} parent=1 // pred_region
      _
    $region21: #{tpu_custom_call.1} parent=1 // pred_fallthru
      _
    // Predicated region
    $region22: #{tpu_custom_call.1} parent=1 // pred_check
      _
    $region23: #{tpu_custom_call.1} parent=1 // pred_check_branch
      %34 = sbr.rel (0) target = $region25
    $region24: #{tpu_custom_call.1} parent=1 // pred_region
      %36 = dma.done [#allocation3], 8192
    $region25: #{tpu_custom_call.1} parent=1 // pred_fallthru
      _
    %v37 = vld [vmem:[#allocation2] sm:$0xff]
    %v38 = vld [vmem:[#allocation2 + $0x8] sm:$0xff]
    %v39 = vld [vmem:[#allocation2 + $0x10] sm:$0xff]
    %v40 = vld [vmem:[#allocation2 + $0x18] sm:$0xff]
    %v41 = vld [vmem:[#allocation2 + $0x20] sm:$0xff]
    %v42 = vld [vmem:[#allocation2 + $0x28] sm:$0xff]
    %v43 = vld [vmem:[#allocation2 + $0x30] sm:$0xff]
    %v44 = vld [vmem:[#allocation2 + $0x38] sm:$0xff]
    %v45 = vld [vmem:[#allocation2 + $0x40] sm:$0xff]
    %v46 = vld [vmem:[#allocation2 + $0x48] sm:$0xff]
    %v47 = vld [vmem:[#allocation2 + $0x50] sm:$0xff]
    %v48 = vld [vmem:[#allocation2 + $0x58] sm:$0xff]
    %v49 = vld [vmem:[#allocation2 + $0x60] sm:$0xff]
    %v50 = vld [vmem:[#allocation2 + $0x68] sm:$0xff]
    %v51 = vld [vmem:[#allocation2 + $0x70] sm:$0xff]
    %v52 = vld [vmem:[#allocation2 + $0x78] sm:$0xff]
    %v53 = vld [vmem:[#allocation2 + $0x80] sm:$0xff]
    %v54 = vld [vmem:[#allocation2 + $0x88] sm:$0xff]
    %v55 = vld [vmem:[#allocation2 + $0x90] sm:$0xff]
    %v56 = vld [vmem:[#allocation2 + $0x98] sm:$0xff]
    %v57 = vld [vmem:[#allocation2 + $0xa0] sm:$0xff]
    %v58 = vld [vmem:[#allocation2 + $0xa8] sm:$0xff]
    %v59 = vld [vmem:[#allocation2 + $0xb0] sm:$0xff]
    %v60 = vld [vmem:[#allocation2 + $0xb8] sm:$0xff]
    %v61 = vld [vmem:[#allocation2 + $0xc0] sm:$0xff]
    %v62 = vld [vmem:[#allocation2 + $0xc8] sm:$0xff]
    %v63 = vld [vmem:[#allocation2 + $0xd0] sm:$0xff]
    %v64 = vld [vmem:[#allocation2 + $0xd8] sm:$0xff]
    %v65 = vld [vmem:[#allocation2 + $0xe0] sm:$0xff]
    %v66 = vld [vmem:[#allocation2 + $0xe8] sm:$0xff]
    %v67 = vld [vmem:[#allocation2 + $0xf0] sm:$0xff]
    %v68 = vld [vmem:[#allocation2 + $0xf8] sm:$0xff]
    %v69 = vld [vmem:[#allocation2 + $0x100] sm:$0xff]
    %v70 = vld [vmem:[#allocation2 + $0x108] sm:$0xff]
    %v71 = vld [vmem:[#allocation2 + $0x110] sm:$0xff]
    %v72 = vld [vmem:[#allocation2 + $0x118] sm:$0xff]
    %v73 = vld [vmem:[#allocation2 + $0x120] sm:$0xff]
    %v74 = vld [vmem:[#allocation2 + $0x128] sm:$0xff]
    %v75 = vld [vmem:[#allocation2 + $0x130] sm:$0xff]
    %v76 = vld [vmem:[#allocation2 + $0x138] sm:$0xff]
    %v77 = vld [vmem:[#allocation2 + $0x140] sm:$0xff]
    %v78 = vld [vmem:[#allocation2 + $0x148] sm:$0xff]
    %v79 = vld [vmem:[#allocation2 + $0x150] sm:$0xff]
    %v80 = vld [vmem:[#allocation2 + $0x158] sm:$0xff]
    %v81 = vld [vmem:[#allocation2 + $0x160] sm:$0xff]
    %v82 = vld [vmem:[#allocation2 + $0x168] sm:$0xff]
    %v83 = vld [vmem:[#allocation2 + $0x170] sm:$0xff]
    %v84 = vld [vmem:[#allocation2 + $0x178] sm:$0xff]
    %v85 = vld [vmem:[#allocation2 + $0x180] sm:$0xff]
    %v86 = vld [vmem:[#allocation2 + $0x188] sm:$0xff]
    %v87 = vld [vmem:[#allocation2 + $0x190] sm:$0xff]
    %v88 = vld [vmem:[#allocation2 + $0x198] sm:$0xff]
    %v89 = vld [vmem:[#allocation2 + $0x1a0] sm:$0xff]
    %v90 = vld [vmem:[#allocation2 + $0x1a8] sm:$0xff]
    %v91 = vld [vmem:[#allocation2 + $0x1b0] sm:$0xff]
    %v92 = vld [vmem:[#allocation2 + $0x1b8] sm:$0xff]
    %v93 = vld [vmem:[#allocation2 + $0x1c0] sm:$0xff]
    %v94 = vld [vmem:[#allocation2 + $0x1c8] sm:$0xff]
    %v95 = vld [vmem:[#allocation2 + $0x1d0] sm:$0xff]
    %v96 = vld [vmem:[#allocation2 + $0x1d8] sm:$0xff]
    %v97 = vld [vmem:[#allocation2 + $0x1e0] sm:$0xff]
    %v98 = vld [vmem:[#allocation2 + $0x1e8] sm:$0xff]
    %v99 = vld [vmem:[#allocation2 + $0x1f0] sm:$0xff]
    %v100 = vld [vmem:[#allocation2 + $0x1f8] sm:$0xff]
    %v101 = vmax.f32 %v37, %v38
    %102 = vmax.xlane.f32.xlu0 %v101
    %v103 = vpop.xlane.xlu0 %102
    %v104 = vmax.f32 %v39, %v40
    %105 = vmax.xlane.f32.xlu0 %v104
    %v106 = vpop.xlane.xlu0 %105
    %v107 = vmax.f32 %v41, %v42
    %108 = vmax.xlane.f32.xlu0 %v107
    %v109 = vpop.xlane.xlu0 %108
    %v110 = vmax.f32 %v43, %v44
    %111 = vmax.xlane.f32.xlu0 %v110
    %v112 = vpop.xlane.xlu0 %111
    %v113 = vmax.f32 %v45, %v46
    %114 = vmax.xlane.f32.xlu0 %v113
    %v115 = vpop.xlane.xlu0 %114
    %v116 = vmax.f32 %v47, %v48
    %117 = vmax.xlane.f32.xlu0 %v116
    %v118 = vpop.xlane.xlu0 %117
    %v119 = vmax.f32 %v49, %v50
    %120 = vmax.xlane.f32.xlu0 %v119
    %v121 = vpop.xlane.xlu0 %120
    %v122 = vmax.f32 %v51, %v52
    %123 = vmax.xlane.f32.xlu0 %v122
    %v124 = vpop.xlane.xlu0 %123
    %v125 = vmax.f32 %v53, %v54
    %126 = vmax.xlane.f32.xlu0 %v125
    %v127 = vpop.xlane.xlu0 %126
    %v128 = vmax.f32 %v55, %v56
    %129 = vmax.xlane.f32.xlu0 %v128
    %v130 = vpop.xlane.xlu0 %129
    %v131 = vmax.f32 %v57, %v58
    %132 = vmax.xlane.f32.xlu0 %v131
    %v133 = vpop.xlane.xlu0 %132
    %v134 = vmax.f32 %v59, %v60
    %135 = vmax.xlane.f32.xlu0 %v134
    %v136 = vpop.xlane.xlu0 %135
    %v137 = vmax.f32 %v61, %v62
    %138 = vmax.xlane.f32.xlu0 %v137
    %v139 = vpop.xlane.xlu0 %138
    %v140 = vmax.f32 %v63, %v64
    %141 = vmax.xlane.f32.xlu0 %v140
    %v142 = vpop.xlane.xlu0 %141
    %v143 = vmax.f32 %v65, %v66
    %144 = vmax.xlane.f32.xlu0 %v143
    %v145 = vpop.xlane.xlu0 %144
    %v146 = vmax.f32 %v67, %v68
    %147 = vmax.xlane.f32.xlu0 %v146
    %v148 = vpop.xlane.xlu0 %147
    %v149 = vmax.f32 %v69, %v70
    %150 = vmax.xlane.f32.xlu0 %v149
    %v151 = vpop.xlane.xlu0 %150
    %v152 = vmax.f32 %v71, %v72
    %153 = vmax.xlane.f32.xlu0 %v152
    %v154 = vpop.xlane.xlu0 %153
    %v155 = vmax.f32 %v73, %v74
    %156 = vmax.xlane.f32.xlu0 %v155
    %v157 = vpop.xlane.xlu0 %156
    %v158 = vmax.f32 %v75, %v76
    %159 = vmax.xlane.f32.xlu0 %v158
    %v160 = vpop.xlane.xlu0 %159
    %v161 = vmax.f32 %v77, %v78
    %162 = vmax.xlane.f32.xlu0 %v161
    %v163 = vpop.xlane.xlu0 %162
    %v164 = vmax.f32 %v79, %v80
    %165 = vmax.xlane.f32.xlu0 %v164
    %v166 = vpop.xlane.xlu0 %165
    %v167 = vmax.f32 %v81, %v82
    %168 = vmax.xlane.f32.xlu0 %v167
    %v169 = vpop.xlane.xlu0 %168
    %v170 = vmax.f32 %v83, %v84
    %171 = vmax.xlane.f32.xlu0 %v170
    %v172 = vpop.xlane.xlu0 %171
    %v173 = vmax.f32 %v85, %v86
    %174 = vmax.xlane.f32.xlu0 %v173
    %v175 = vpop.xlane.xlu0 %174
    %v176 = vmax.f32 %v87, %v88
    %177 = vmax.xlane.f32.xlu0 %v176
    %v178 = vpop.xlane.xlu0 %177
    %v179 = vmax.f32 %v89, %v90
    %180 = vmax.xlane.f32.xlu0 %v179
    %v181 = vpop.xlane.xlu0 %180
    %v182 = vmax.f32 %v91, %v92
    %183 = vmax.xlane.f32.xlu0 %v182
    %v184 = vpop.xlane.xlu0 %183
    %v185 = vmax.f32 %v93, %v94
    %186 = vmax.xlane.f32.xlu0 %v185
    %v187 = vpop.xlane.xlu0 %186
    %v188 = vmax.f32 %v95, %v96
    %189 = vmax.xlane.f32.xlu0 %v188
    %v190 = vpop.xlane.xlu0 %189
    %v191 = vmax.f32 %v97, %v98
    %192 = vmax.xlane.f32.xlu0 %v191
    %v193 = vpop.xlane.xlu0 %192
    %v194 = vmax.f32 %v99, %v100
    %195 = vmax.xlane.f32.xlu0 %v194
    %v196 = vpop.xlane.xlu0 %195
    %v197 = vadd.f32 %v37, %v38
    %198 = vadd.xlane.f32.xlu0 %v197
    %v199 = vpop.xlane.xlu0 %198
    %v200 = vadd.f32 %v39, %v40
    %201 = vadd.xlane.f32.xlu0 %v200
    %v202 = vpop.xlane.xlu0 %201
    %v203 = vadd.f32 %v41, %v42
    %204 = vadd.xlane.f32.xlu0 %v203
    %v205 = vpop.xlane.xlu0 %204
    %v206 = vadd.f32 %v43, %v44
    %207 = vadd.xlane.f32.xlu0 %v206
    %v208 = vpop.xlane.xlu0 %207
    %v209 = vadd.f32 %v45, %v46
    %210 = vadd.xlane.f32.xlu0 %v209
    %v211 = vpop.xlane.xlu0 %210
    %v212 = vadd.f32 %v47, %v48
    %213 = vadd.xlane.f32.xlu0 %v212
    %v214 = vpop.xlane.xlu0 %213
    %v215 = vadd.f32 %v49, %v50
    %216 = vadd.xlane.f32.xlu0 %v215
    %v217 = vpop.xlane.xlu0 %216
    %v218 = vadd.f32 %v51, %v52
    %219 = vadd.xlane.f32.xlu0 %v218
    %v220 = vpop.xlane.xlu0 %219
    %v221 = vadd.f32 %v53, %v54
    %222 = vadd.xlane.f32.xlu0 %v221
    %v223 = vpop.xlane.xlu0 %222
    %v224 = vadd.f32 %v55, %v56
    %225 = vadd.xlane.f32.xlu0 %v224
    %v226 = vpop.xlane.xlu0 %225
    %v227 = vadd.f32 %v57, %v58
    %228 = vadd.xlane.f32.xlu0 %v227
    %v229 = vpop.xlane.xlu0 %228
    %v230 = vadd.f32 %v59, %v60
    %231 = vadd.xlane.f32.xlu0 %v230
    %v232 = vpop.xlane.xlu0 %231
    %v233 = vadd.f32 %v61, %v62
    %234 = vadd.xlane.f32.xlu0 %v233
    %v235 = vpop.xlane.xlu0 %234
    %v236 = vadd.f32 %v63, %v64
    %237 = vadd.xlane.f32.xlu0 %v236
    %v238 = vpop.xlane.xlu0 %237
    %v239 = vadd.f32 %v65, %v66
    %240 = vadd.xlane.f32.xlu0 %v239
    %v241 = vpop.xlane.xlu0 %240
    %v242 = vadd.f32 %v67, %v68
    %243 = vadd.xlane.f32.xlu0 %v242
    %v244 = vpop.xlane.xlu0 %243
    %v245 = vadd.f32 %v69, %v70
    %246 = vadd.xlane.f32.xlu0 %v245
    %v247 = vpop.xlane.xlu0 %246
    %v248 = vadd.f32 %v71, %v72
    %249 = vadd.xlane.f32.xlu0 %v248
    %v250 = vpop.xlane.xlu0 %249
    %v251 = vadd.f32 %v73, %v74
    %252 = vadd.xlane.f32.xlu0 %v251
    %v253 = vpop.xlane.xlu0 %252
    %v254 = vadd.f32 %v75, %v76
    %255 = vadd.xlane.f32.xlu0 %v254
    %v256 = vpop.xlane.xlu0 %255
    %v257 = vadd.f32 %v77, %v78
    %258 = vadd.xlane.f32.xlu0 %v257
    %v259 = vpop.xlane.xlu0 %258
    %v260 = vadd.f32 %v79, %v80
    %261 = vadd.xlane.f32.xlu0 %v260
    %v262 = vpop.xlane.xlu0 %261
    %v263 = vadd.f32 %v81, %v82
    %264 = vadd.xlane.f32.xlu0 %v263
    %v265 = vpop.xlane.xlu0 %264
    %v266 = vadd.f32 %v83, %v84
    %267 = vadd.xlane.f32.xlu0 %v266
    %v268 = vpop.xlane.xlu0 %267
    %v269 = vadd.f32 %v85, %v86
    %270 = vadd.xlane.f32.xlu0 %v269
    %v271 = vpop.xlane.xlu0 %270
    %v272 = vadd.f32 %v87, %v88
    %273 = vadd.xlane.f32.xlu0 %v272
    %v274 = vpop.xlane.xlu0 %273
    %v275 = vadd.f32 %v89, %v90
    %276 = vadd.xlane.f32.xlu0 %v275
    %v277 = vpop.xlane.xlu0 %276
    %v278 = vadd.f32 %v91, %v92
    %279 = vadd.xlane.f32.xlu0 %v278
    %v280 = vpop.xlane.xlu0 %279
    %v281 = vadd.f32 %v93, %v94
    %282 = vadd.xlane.f32.xlu0 %v281
    %v283 = vpop.xlane.xlu0 %282
    %v284 = vadd.f32 %v95, %v96
    %285 = vadd.xlane.f32.xlu0 %v284
    %v286 = vpop.xlane.xlu0 %285
    %v287 = vadd.f32 %v97, %v98
    %288 = vadd.xlane.f32.xlu0 %v287
    %v289 = vpop.xlane.xlu0 %288
    %v290 = vadd.f32 %v99, %v100
    %291 = vadd.xlane.f32.xlu0 %v290
    %v292 = vpop.xlane.xlu0 %291
    %v293 = vmul.f32 %v199, 0.00390625
    %v294 = vmul.f32 %v202, 0.00390625
    %v295 = vmul.f32 %v205, 0.00390625
    %v296 = vmul.f32 %v208, 0.00390625
    %v297 = vmul.f32 %v211, 0.00390625
    %v298 = vmul.f32 %v214, 0.00390625
    %v299 = vmul.f32 %v217, 0.00390625
    %v300 = vmul.f32 %v220, 0.00390625
    %v301 = vmul.f32 %v223, 0.00390625
    %v302 = vmul.f32 %v226, 0.00390625
    %v303 = vmul.f32 %v229, 0.00390625
    %v304 = vmul.f32 %v232, 0.00390625
    %v305 = vmul.f32 %v235, 0.00390625
    %v306 = vmul.f32 %v238, 0.00390625
    %v307 = vmul.f32 %v241, 0.00390625
    %v308 = vmul.f32 %v244, 0.00390625
    %v309 = vmul.f32 %v247, 0.00390625
    %v310 = vmul.f32 %v250, 0.00390625
    %v311 = vmul.f32 %v253, 0.00390625
    %v312 = vmul.f32 %v256, 0.00390625
    %v313 = vmul.f32 %v259, 0.00390625
    %v314 = vmul.f32 %v262, 0.00390625
    %v315 = vmul.f32 %v265, 0.00390625
    %v316 = vmul.f32 %v268, 0.00390625
    %v317 = vmul.f32 %v271, 0.00390625
    %v318 = vmul.f32 %v274, 0.00390625
    %v319 = vmul.f32 %v277, 0.00390625
    %v320 = vmul.f32 %v280, 0.00390625
    %v321 = vmul.f32 %v283, 0.00390625
    %v322 = vmul.f32 %v286, 0.00390625
    %v323 = vmul.f32 %v289, 0.00390625
    %v324 = vmul.f32 %v292, 0.00390625
    %v357 = vlaneseq
    %v358 = vand.u32 %v357, 127
    %v359 = vperm.slane %v103, %v358
    %v360 = vadd.s32 %v358, 4294967288
    %v361 = vperm.slane %v106, %v360
    %vm362 = vcmask 130112
    %v363 = vsel %vm362, %v361, %v359
    %v364 = vadd.s32 %v358, 4294967280
    %v365 = vperm.slane %v109, %v364
    %vm366 = vcmask 195712
    %v367 = vsel %vm366, %v365, %v363
    %v368 = vadd.s32 %v358, 4294967272
    %v369 = vperm.slane %v112, %v368
    %vm370 = vcmask 261312
    %v371 = vsel %vm370, %v369, %v367
    %v372 = vadd.s32 %v358, 4294967264
    %v373 = vperm.slane %v115, %v372
    %vm374 = vcmask 326912
    %v375 = vsel %vm374, %v373, %v371
    %v376 = vadd.s32 %v358, 4294967256
    %v377 = vperm.slane %v118, %v376
    %vm378 = vcmask 392512
    %v379 = vsel %vm378, %v377, %v375
    %v380 = vadd.s32 %v358, 4294967248
    %v381 = vperm.slane %v121, %v380
    %vm382 = vcmask 458112
    %v383 = vsel %vm382, %v381, %v379
    %v384 = vadd.s32 %v358, 4294967240
    %v385 = vperm.slane %v124, %v384
    %vm386 = vcmask 523712
    %v387 = vsel %vm386, %v385, %v383
    %v388 = vadd.s32 %v358, 4294967232
    %v389 = vperm.slane %v127, %v388
    %vm390 = vcmask 589312
    %v391 = vsel %vm390, %v389, %v387
    %v392 = vadd.s32 %v358, 4294967224
    %v393 = vperm.slane %v130, %v392
    %vm394 = vcmask 654912
    %v395 = vsel %vm394, %v393, %v391
    %v396 = vadd.s32 %v358, 4294967216
    %v397 = vperm.slane %v133, %v396
    %vm398 = vcmask 720512
    %v399 = vsel %vm398, %v397, %v395
    %v400 = vadd.s32 %v358, 4294967208
    %v401 = vperm.slane %v136, %v400
    %vm402 = vcmask 786112
    %v403 = vsel %vm402, %v401, %v399
    %v404 = vadd.s32 %v358, 4294967200
    %v405 = vperm.slane %v139, %v404
    %vm406 = vcmask 851712
    %v407 = vsel %vm406, %v405, %v403
    %v408 = vadd.s32 %v358, 4294967192
    %v409 = vperm.slane %v142, %v408
    %vm410 = vcmask 917312
    %v411 = vsel %vm410, %v409, %v407
    %v412 = vadd.s32 %v358, 4294967184
    %v413 = vperm.slane %v145, %v412
    %vm414 = vcmask 982912
    %v415 = vsel %vm414, %v413, %v411
    %v416 = vadd.s32 %v358, 4294967176
    %v417 = vperm.slane %v148, %v416
    %vm418 = vcmask 1048512
    %v419 = vsel %vm418, %v417, %v415
    %v420 = vperm.slane %v151, %v358
    %v421 = vperm.slane %v154, %v360
    %v422 = vsel %vm362, %v421, %v420
    %v423 = vperm.slane %v157, %v364
    %v424 = vsel %vm366, %v423, %v422
    %v425 = vperm.slane %v160, %v368
    %v426 = vsel %vm370, %v425, %v424
    %v427 = vperm.slane %v163, %v372
    %v428 = vsel %vm374, %v427, %v426
    %v429 = vperm.slane %v166, %v376
    %v430 = vsel %vm378, %v429, %v428
    %v431 = vperm.slane %v169, %v380
    %v432 = vsel %vm382, %v431, %v430
    %v433 = vperm.slane %v172, %v384
    %v434 = vsel %vm386, %v433, %v432
    %v435 = vperm.slane %v175, %v388
    %v436 = vsel %vm390, %v435, %v434
    %v437 = vperm.slane %v178, %v392
    %v438 = vsel %vm394, %v437, %v436
    %v439 = vperm.slane %v181, %v396
    %v440 = vsel %vm398, %v439, %v438
    %v441 = vperm.slane %v184, %v400
    %v442 = vsel %vm402, %v441, %v440
    %v443 = vperm.slane %v187, %v404
    %v444 = vsel %vm406, %v443, %v442
    %v445 = vperm.slane %v190, %v408
    %v446 = vsel %vm410, %v445, %v444
    %v447 = vperm.slane %v193, %v412
    %v448 = vsel %vm414, %v447, %v446
    %v449 = vperm.slane %v196, %v416
    %v450 = vsel %vm418, %v449, %v448
    %vm451 = vcmask 1041409
    %v452 = vsel %vm451, %v450, %v419
    %v486 = vperm.slane %v293, %v358
    %v487 = vperm.slane %v294, %v360
    %v488 = vsel %vm362, %v487, %v486
    %v489 = vperm.slane %v295, %v364
    %v490 = vsel %vm366, %v489, %v488
    %v491 = vperm.slane %v296, %v368
    %v492 = vsel %vm370, %v491, %v490
    %v493 = vperm.slane %v297, %v372
    %v494 = vsel %vm374, %v493, %v492
    %v495 = vperm.slane %v298, %v376
    %v496 = vsel %vm378, %v495, %v494
    %v497 = vperm.slane %v299, %v380
    %v498 = vsel %vm382, %v497, %v496
    %v499 = vperm.slane %v300, %v384
    %v500 = vsel %vm386, %v499, %v498
    %v501 = vperm.slane %v301, %v388
    %v502 = vsel %vm390, %v501, %v500
    %v503 = vperm.slane %v302, %v392
    %v504 = vsel %vm394, %v503, %v502
    %v505 = vperm.slane %v303, %v396
    %v506 = vsel %vm398, %v505, %v504
    %v507 = vperm.slane %v304, %v400
    %v508 = vsel %vm402, %v507, %v506
    %v509 = vperm.slane %v305, %v404
    %v510 = vsel %vm406, %v509, %v508
    %v511 = vperm.slane %v306, %v408
    %v512 = vsel %vm410, %v511, %v510
    %v513 = vperm.slane %v307, %v412
    %v514 = vsel %vm414, %v513, %v512
    %v515 = vperm.slane %v308, %v416
    %v516 = vsel %vm418, %v515, %v514
    %v517 = vperm.slane %v309, %v358
    %v518 = vperm.slane %v310, %v360
    %v519 = vsel %vm362, %v518, %v517
    %v520 = vperm.slane %v311, %v364
    %v521 = vsel %vm366, %v520, %v519
    %v522 = vperm.slane %v312, %v368
    %v523 = vsel %vm370, %v522, %v521
    %v524 = vperm.slane %v313, %v372
    %v525 = vsel %vm374, %v524, %v523
    %v526 = vperm.slane %v314, %v376
    %v527 = vsel %vm378, %v526, %v525
    %v528 = vperm.slane %v315, %v380
    %v529 = vsel %vm382, %v528, %v527
    %v530 = vperm.slane %v316, %v384
    %v531 = vsel %vm386, %v530, %v529
    %v532 = vperm.slane %v317, %v388
    %v533 = vsel %vm390, %v532, %v531
    %v534 = vperm.slane %v318, %v392
    %v535 = vsel %vm394, %v534, %v533
    %v536 = vperm.slane %v319, %v396
    %v537 = vsel %vm398, %v536, %v535
    %v538 = vperm.slane %v320, %v400
    %v539 = vsel %vm402, %v538, %v537
    %v540 = vperm.slane %v321, %v404
    %v541 = vsel %vm406, %v540, %v539
    %v542 = vperm.slane %v322, %v408
    %v543 = vsel %vm410, %v542, %v541
    %v544 = vperm.slane %v323, %v412
    %v545 = vsel %vm414, %v544, %v543
    %v546 = vperm.slane %v324, %v416
    %v547 = vsel %vm418, %v546, %v545
    %vm548 = vcmask 1043459
    %v549 = vsel %vm548, %v547, %v516
    %vm551 = vcmask 1041408
    %v552 = vsel %vm551, %v452, %v549
    %v553 = vld [vmem:[%s1] sm:$0xff]
    %v554 = vld [vmem:[%s1 + $0x8] sm:$0xff]
    %v555 = vld [vmem:[%s1 + $0x10] sm:$0xff]
    %v556 = vld [vmem:[%s1 + $0x18] sm:$0xff]
    %v557 = vld [vmem:[%s1 + $0x20] sm:$0xff]
    %v558 = vld [vmem:[%s1 + $0x28] sm:$0xff]
    %v559 = vld [vmem:[%s1 + $0x30] sm:$0xff]
    %v560 = vld [vmem:[%s1 + $0x38] sm:$0xff]
    %v561 = vld [vmem:[%s1 + $0x40] sm:$0xff]
    %v562 = vld [vmem:[%s1 + $0x48] sm:$0xff]
    %v563 = vld [vmem:[%s1 + $0x50] sm:$0xff]
    %v564 = vld [vmem:[%s1 + $0x58] sm:$0xff]
    %v565 = vld [vmem:[%s1 + $0x60] sm:$0xff]
    %v566 = vld [vmem:[%s1 + $0x68] sm:$0xff]
    %v567 = vld [vmem:[%s1 + $0x70] sm:$0xff]
    %v568 = vld [vmem:[%s1 + $0x78] sm:$0xff]
    %v569 = vld [vmem:[%s2] sm:$0x1]
    %v571 = vperm.slane %v569, 0
    %573 = vmatpush.msra.mxu0 %v568
    %574 = vmatpush.msra.mxu0 %v567
    %575 = vmatpush.msra.mxu0 %v566
    %576 = vmatpush.msra.mxu0 %v565
    %577 = vmatpush.msra.mxu0 %v564
    %578 = vmatpush.msra.mxu0 %v563
    %579 = vmatpush.msra.mxu0 %v562
    %580 = vmatpush.msra.mxu0 %v561
    %581 = vmatpush.msra.mxu0 %v560
    %582 = vmatpush.msra.mxu0 %v559
    %583 = vmatpush.msra.mxu0 %v558
    %584 = vmatpush.msra.mxu0 %v557
    %585 = vmatpush.msra.mxu0 %v556
    %586 = vmatpush.msra.mxu0 %v555
    %587 = vmatpush.msra.mxu0 %v554
    %588 = vmatpush.msra.mxu0 %v553
    %589 = vmatmul.f32.gmra.mxu0 %v552
    %v590 = vpop.f32.mrf.mxu0
    %v591 = vadd.f32 %v571, %v590
    %592 = vdwg.mxu0
    %v593 = vmax.f32 %v591, 0.0
    %v594 = vld [vmem:[%s3] sm:$0xff]
    %v595 = vld [vmem:[%s3 + $0x8] sm:$0xff]
    %v596 = vld [vmem:[%s3 + $0x10] sm:$0xff]
    %v597 = vld [vmem:[%s3 + $0x18] sm:$0xff]
    %v598 = vld [vmem:[%s4] sm:$0x1]
    %v600 = vperm.slane %v598, 0
    %vm602 = vcmask 261120
    %v604 = vsel %vm602, %v593, 0
    %606 = vmatpush.msra.mxu0 0.0
    %607 = vmatpush.msra.mxu0 0.0
    %608 = vmatpush.msra.mxu0 0.0
    %609 = vmatpush.msra.mxu0 0.0
    %610 = vmatpush.msra.mxu0 0.0
    %611 = vmatpush.msra.mxu0 0.0
    %612 = vmatpush.msra.mxu0 0.0
    %613 = vmatpush.msra.mxu0 0.0
    %614 = vmatpush.msra.mxu0 0.0
    %615 = vmatpush.msra.mxu0 0.0
    %616 = vmatpush.msra.mxu0 0.0
    %617 = vmatpush.msra.mxu0 0.0
    %618 = vmatpush.msra.mxu0 %v597
    %619 = vmatpush.msra.mxu0 %v596
    %620 = vmatpush.msra.mxu0 %v595
    %621 = vmatpush.msra.mxu0 %v594
    %622 = vmatmul.f32.gmra.mxu0 %v604
    %v623 = vpop.f32.mrf.mxu0
    %v624 = vadd.f32 %v600, %v623
    %625 = vdwg.mxu0
    %v627 = vrot.slane %v624, 2
    %v629 = vadd.f32 %v624, %v627
    %v630 = vxor.u32 %v629, 2147483648
    %v631 = vmul.f32 %v630, 1.442695
    %v632 = vpow.pop %v631
    %v633 = vadd.f32 %v632, 1.0
    %v634 = vrcp.pop %v633
    %v635 = vmul.f32 %v633, %v634
    %v636 = vsub.f32 1.0, %v635
    %v637 = vmul.f32 %v634, %v636
    %v638 = vadd.f32 %v634, %v637
    %vm639 = vweird.f32 %v633
    %vm640 = vweird.f32 %v634
    %vm641 = vmor %vm639, %vm640
    %v642 = vsel %vm641, %v634, %v638
    %v643 = vand.u32 2147483647, %v633
    %vm644 = vcmp.eq.f32.partialorder %v643, 8.507059e+37
    %v645 = vand.u32 %v633, 2147483648
    %v646 = vor.u32 1.1754944e-38, %v645
    %v647 = vsel %vm644, %v646, %v642
    %v648 = vmul.f32 1.0, %v647
    %v649 = vperm.slane %v648, 0
    %v650 = vlaneseq
    %v651 = vshrl.u32 %v650, 7
    %653 = vset.pattern.permute.xlu0 %v651
    %654 = vperm.xlu0 %653, %v649
    %v655 = vpop.permute.xlu0 %654
    %v656 = vlaneseq
    %v657 = vshrl.u32 %v656, 7
    %v658 = vadd.s32 %v657, 8
    %659 = vset.pattern.permute.xlu0 %v658
    %660 = vperm.xlu0 %659, %v649
    %v661 = vpop.permute.xlu0 %660
    %v662 = vlaneseq
    %v663 = vshrl.u32 %v662, 7
    %v664 = vadd.s32 %v663, 16
    %665 = vset.pattern.permute.xlu0 %v664
    %666 = vperm.xlu0 %665, %v649
    %v667 = vpop.permute.xlu0 %666
    %v668 = vlaneseq
    %v669 = vshrl.u32 %v668, 7
    %v670 = vadd.s32 %v669, 24
    %671 = vset.pattern.permute.xlu0 %v670
    %672 = vperm.xlu0 %671, %v649
    %v673 = vpop.permute.xlu0 %672
    %v674 = vlaneseq
    %v675 = vshrl.u32 %v674, 7
    %v676 = vadd.s32 %v675, 32
    %677 = vset.pattern.permute.xlu0 %v676
    %678 = vperm.xlu0 %677, %v649
    %v679 = vpop.permute.xlu0 %678
    %v680 = vlaneseq
    %v681 = vshrl.u32 %v680, 7
    %v682 = vadd.s32 %v681, 40
    %683 = vset.pattern.permute.xlu0 %v682
    %684 = vperm.xlu0 %683, %v649
    %v685 = vpop.permute.xlu0 %684
    %v686 = vlaneseq
    %v687 = vshrl.u32 %v686, 7
    %v688 = vadd.s32 %v687, 48
    %689 = vset.pattern.permute.xlu0 %v688
    %690 = vperm.xlu0 %689, %v649
    %v691 = vpop.permute.xlu0 %690
    %v692 = vlaneseq
    %v693 = vshrl.u32 %v692, 7
    %v694 = vadd.s32 %v693, 56
    %695 = vset.pattern.permute.xlu0 %v694
    %696 = vperm.xlu0 %695, %v649
    %v697 = vpop.permute.xlu0 %696
    %v698 = vlaneseq
    %v699 = vshrl.u32 %v698, 7
    %v700 = vadd.s32 %v699, 64
    %701 = vset.pattern.permute.xlu0 %v700
    %702 = vperm.xlu0 %701, %v649
    %v703 = vpop.permute.xlu0 %702
    %v704 = vlaneseq
    %v705 = vshrl.u32 %v704, 7
    %v706 = vadd.s32 %v705, 72
    %707 = vset.pattern.permute.xlu0 %v706
    %708 = vperm.xlu0 %707, %v649
    %v709 = vpop.permute.xlu0 %708
    %v710 = vlaneseq
    %v711 = vshrl.u32 %v710, 7
    %v712 = vadd.s32 %v711, 80
    %713 = vset.pattern.permute.xlu0 %v712
    %714 = vperm.xlu0 %713, %v649
    %v715 = vpop.permute.xlu0 %714
    %v716 = vlaneseq
    %v717 = vshrl.u32 %v716, 7
    %v718 = vadd.s32 %v717, 88
    %719 = vset.pattern.permute.xlu0 %v718
    %720 = vperm.xlu0 %719, %v649
    %v721 = vpop.permute.xlu0 %720
    %v722 = vlaneseq
    %v723 = vshrl.u32 %v722, 7
    %v724 = vadd.s32 %v723, 96
    %725 = vset.pattern.permute.xlu0 %v724
    %726 = vperm.xlu0 %725, %v649
    %v727 = vpop.permute.xlu0 %726
    %v728 = vlaneseq
    %v729 = vshrl.u32 %v728, 7
    %v730 = vadd.s32 %v729, 104
    %731 = vset.pattern.permute.xlu0 %v730
    %732 = vperm.xlu0 %731, %v649
    %v733 = vpop.permute.xlu0 %732
    %v734 = vlaneseq
    %v735 = vshrl.u32 %v734, 7
    %v736 = vadd.s32 %v735, 112
    %737 = vset.pattern.permute.xlu0 %v736
    %738 = vperm.xlu0 %737, %v649
    %v739 = vpop.permute.xlu0 %738
    %v740 = vlaneseq
    %v741 = vshrl.u32 %v740, 7
    %v742 = vadd.s32 %v741, 120
    %743 = vset.pattern.permute.xlu0 %v742
    %744 = vperm.xlu0 %743, %v649
    %v745 = vpop.permute.xlu0 %744
    %v746 = vperm.slane %v648, 1
    %v747 = vlaneseq
    %v748 = vshrl.u32 %v747, 7
    %750 = vset.pattern.permute.xlu0 %v748
    %751 = vperm.xlu0 %750, %v746
    %v752 = vpop.permute.xlu0 %751
    %v753 = vlaneseq
    %v754 = vshrl.u32 %v753, 7
    %v755 = vadd.s32 %v754, 8
    %756 = vset.pattern.permute.xlu0 %v755
    %757 = vperm.xlu0 %756, %v746
    %v758 = vpop.permute.xlu0 %757
    %v759 = vlaneseq
    %v760 = vshrl.u32 %v759, 7
    %v761 = vadd.s32 %v760, 16
    %762 = vset.pattern.permute.xlu0 %v761
    %763 = vperm.xlu0 %762, %v746
    %v764 = vpop.permute.xlu0 %763
    %v765 = vlaneseq
    %v766 = vshrl.u32 %v765, 7
    %v767 = vadd.s32 %v766, 24
    %768 = vset.pattern.permute.xlu0 %v767
    %769 = vperm.xlu0 %768, %v746
    %v770 = vpop.permute.xlu0 %769
    %v771 = vlaneseq
    %v772 = vshrl.u32 %v771, 7
    %v773 = vadd.s32 %v772, 32
    %774 = vset.pattern.permute.xlu0 %v773
    %775 = vperm.xlu0 %774, %v746
    %v776 = vpop.permute.xlu0 %775
    %v777 = vlaneseq
    %v778 = vshrl.u32 %v777, 7
    %v779 = vadd.s32 %v778, 40
    %780 = vset.pattern.permute.xlu0 %v779
    %781 = vperm.xlu0 %780, %v746
    %v782 = vpop.permute.xlu0 %781
    %v783 = vlaneseq
    %v784 = vshrl.u32 %v783, 7
    %v785 = vadd.s32 %v784, 48
    %786 = vset.pattern.permute.xlu0 %v785
    %787 = vperm.xlu0 %786, %v746
    %v788 = vpop.permute.xlu0 %787
    %v789 = vlaneseq
    %v790 = vshrl.u32 %v789, 7
    %v791 = vadd.s32 %v790, 56
    %792 = vset.pattern.permute.xlu0 %v791
    %793 = vperm.xlu0 %792, %v746
    %v794 = vpop.permute.xlu0 %793
    %v795 = vlaneseq
    %v796 = vshrl.u32 %v795, 7
    %v797 = vadd.s32 %v796, 64
    %798 = vset.pattern.permute.xlu0 %v797
    %799 = vperm.xlu0 %798, %v746
    %v800 = vpop.permute.xlu0 %799
    %v801 = vlaneseq
    %v802 = vshrl.u32 %v801, 7
    %v803 = vadd.s32 %v802, 72
    %804 = vset.pattern.permute.xlu0 %v803
    %805 = vperm.xlu0 %804, %v746
    %v806 = vpop.permute.xlu0 %805
    %v807 = vlaneseq
    %v808 = vshrl.u32 %v807, 7
    %v809 = vadd.s32 %v808, 80
    %810 = vset.pattern.permute.xlu0 %v809
    %811 = vperm.xlu0 %810, %v746
    %v812 = vpop.permute.xlu0 %811
    %v813 = vlaneseq
    %v814 = vshrl.u32 %v813, 7
    %v815 = vadd.s32 %v814, 88
    %816 = vset.pattern.permute.xlu0 %v815
    %817 = vperm.xlu0 %816, %v746
    %v818 = vpop.permute.xlu0 %817
    %v819 = vlaneseq
    %v820 = vshrl.u32 %v819, 7
    %v821 = vadd.s32 %v820, 96
    %822 = vset.pattern.permute.xlu0 %v821
    %823 = vperm.xlu0 %822, %v746
    %v824 = vpop.permute.xlu0 %823
    %v825 = vlaneseq
    %v826 = vshrl.u32 %v825, 7
    %v827 = vadd.s32 %v826, 104
    %828 = vset.pattern.permute.xlu0 %v827
    %829 = vperm.xlu0 %828, %v746
    %v830 = vpop.permute.xlu0 %829
    %v831 = vlaneseq
    %v832 = vshrl.u32 %v831, 7
    %v833 = vadd.s32 %v832, 112
    %834 = vset.pattern.permute.xlu0 %v833
    %835 = vperm.xlu0 %834, %v746
    %v836 = vpop.permute.xlu0 %835
    %v837 = vlaneseq
    %v838 = vshrl.u32 %v837, 7
    %v839 = vadd.s32 %v838, 120
    %840 = vset.pattern.permute.xlu0 %v839
    %841 = vperm.xlu0 %840, %v746
    %v842 = vpop.permute.xlu0 %841
    %v843 = vmul.f32 %v37, %v655
    %v844 = vmul.f32 %v38, %v655
    %v845 = vmul.f32 %v39, %v661
    %v846 = vmul.f32 %v40, %v661
    %v847 = vmul.f32 %v41, %v667
    %v848 = vmul.f32 %v42, %v667
    %v849 = vmul.f32 %v43, %v673
    %v850 = vmul.f32 %v44, %v673
    %v851 = vmul.f32 %v45, %v679
    %v852 = vmul.f32 %v46, %v679
    %v853 = vmul.f32 %v47, %v685
    %v854 = vmul.f32 %v48, %v685
    %v855 = vmul.f32 %v49, %v691
    %v856 = vmul.f32 %v50, %v691
    %v857 = vmul.f32 %v51, %v697
    %v858 = vmul.f32 %v52, %v697
    %v859 = vmul.f32 %v53, %v703
    %v860 = vmul.f32 %v54, %v703
    %v861 = vmul.f32 %v55, %v709
    %v862 = vmul.f32 %v56, %v709
    %v863 = vmul.f32 %v57, %v715
    %v864 = vmul.f32 %v58, %v715
    %v865 = vmul.f32 %v59, %v721
    %v866 = vmul.f32 %v60, %v721
    %v867 = vmul.f32 %v61, %v727
    %v868 = vmul.f32 %v62, %v727
    %v869 = vmul.f32 %v63, %v733
    %v870 = vmul.f32 %v64, %v733
    %v871 = vmul.f32 %v65, %v739
    %v872 = vmul.f32 %v66, %v739
    %v873 = vmul.f32 %v67, %v745
    %v874 = vmul.f32 %v68, %v745
    %v875 = vmul.f32 %v69, %v752
    %v876 = vmul.f32 %v70, %v752
    %v877 = vmul.f32 %v71, %v758
    %v878 = vmul.f32 %v72, %v758
    %v879 = vmul.f32 %v73, %v764
    %v880 = vmul.f32 %v74, %v764
    %v881 = vmul.f32 %v75, %v770
    %v882 = vmul.f32 %v76, %v770
    %v883 = vmul.f32 %v77, %v776
    %v884 = vmul.f32 %v78, %v776
    %v885 = vmul.f32 %v79, %v782
    %v886 = vmul.f32 %v80, %v782
    %v887 = vmul.f32 %v81, %v788
    %v888 = vmul.f32 %v82, %v788
    %v889 = vmul.f32 %v83, %v794
    %v890 = vmul.f32 %v84, %v794
    %v891 = vmul.f32 %v85, %v800
    %v892 = vmul.f32 %v86, %v800
    %v893 = vmul.f32 %v87, %v806
    %v894 = vmul.f32 %v88, %v806
    %v895 = vmul.f32 %v89, %v812
    %v896 = vmul.f32 %v90, %v812
    %v897 = vmul.f32 %v91, %v818
    %v898 = vmul.f32 %v92, %v818
    %v899 = vmul.f32 %v93, %v824
    %v900 = vmul.f32 %v94, %v824
    %v901 = vmul.f32 %v95, %v830
    %v902 = vmul.f32 %v96, %v830
    %v903 = vmul.f32 %v97, %v836
    %v904 = vmul.f32 %v98, %v836
    %v905 = vmul.f32 %v99, %v842
    %v906 = vmul.f32 %v100, %v842
    %907 = vst [vmem:[#allocation5] sm:$0xff] %v843
    %908 = vst [vmem:[#allocation5 + $0x8] sm:$0xff] %v844
    %909 = vst [vmem:[#allocation5 + $0x10] sm:$0xff] %v845
    %910 = vst [vmem:[#allocation5 + $0x18] sm:$0xff] %v846
    %911 = vst [vmem:[#allocation5 + $0x20] sm:$0xff] %v847
    %912 = vst [vmem:[#allocation5 + $0x28] sm:$0xff] %v848
    %913 = vst [vmem:[#allocation5 + $0x30] sm:$0xff] %v849
    %914 = vst [vmem:[#allocation5 + $0x38] sm:$0xff] %v850
    %915 = vst [vmem:[#allocation5 + $0x40] sm:$0xff] %v851
    %916 = vst [vmem:[#allocation5 + $0x48] sm:$0xff] %v852
    %917 = vst [vmem:[#allocation5 + $0x50] sm:$0xff] %v853
    %918 = vst [vmem:[#allocation5 + $0x58] sm:$0xff] %v854
    %919 = vst [vmem:[#allocation5 + $0x60] sm:$0xff] %v855
    %920 = vst [vmem:[#allocation5 + $0x68] sm:$0xff] %v856
    %921 = vst [vmem:[#allocation5 + $0x70] sm:$0xff] %v857
    %922 = vst [vmem:[#allocation5 + $0x78] sm:$0xff] %v858
    %923 = vst [vmem:[#allocation5 + $0x80] sm:$0xff] %v859
    %924 = vst [vmem:[#allocation5 + $0x88] sm:$0xff] %v860
    %925 = vst [vmem:[#allocation5 + $0x90] sm:$0xff] %v861
    %926 = vst [vmem:[#allocation5 + $0x98] sm:$0xff] %v862
    %927 = vst [vmem:[#allocation5 + $0xa0] sm:$0xff] %v863
    %928 = vst [vmem:[#allocation5 + $0xa8] sm:$0xff] %v864
    %929 = vst [vmem:[#allocation5 + $0xb0] sm:$0xff] %v865
    %930 = vst [vmem:[#allocation5 + $0xb8] sm:$0xff] %v866
    %931 = vst [vmem:[#allocation5 + $0xc0] sm:$0xff] %v867
    %932 = vst [vmem:[#allocation5 + $0xc8] sm:$0xff] %v868
    %933 = vst [vmem:[#allocation5 + $0xd0] sm:$0xff] %v869
    %934 = vst [vmem:[#allocation5 + $0xd8] sm:$0xff] %v870
    %935 = vst [vmem:[#allocation5 + $0xe0] sm:$0xff] %v871
    %936 = vst [vmem:[#allocation5 + $0xe8] sm:$0xff] %v872
    %937 = vst [vmem:[#allocation5 + $0xf0] sm:$0xff] %v873
    %938 = vst [vmem:[#allocation5 + $0xf8] sm:$0xff] %v874
    %939 = vst [vmem:[#allocation5 + $0x100] sm:$0xff] %v875
    %940 = vst [vmem:[#allocation5 + $0x108] sm:$0xff] %v876
    %941 = vst [vmem:[#allocation5 + $0x110] sm:$0xff] %v877
    %942 = vst [vmem:[#allocation5 + $0x118] sm:$0xff] %v878
    %943 = vst [vmem:[#allocation5 + $0x120] sm:$0xff] %v879
    %944 = vst [vmem:[#allocation5 + $0x128] sm:$0xff] %v880
    %945 = vst [vmem:[#allocation5 + $0x130] sm:$0xff] %v881
    %946 = vst [vmem:[#allocation5 + $0x138] sm:$0xff] %v882
    %947 = vst [vmem:[#allocation5 + $0x140] sm:$0xff] %v883
    %948 = vst [vmem:[#allocation5 + $0x148] sm:$0xff] %v884
    %949 = vst [vmem:[#allocation5 + $0x150] sm:$0xff] %v885
    %950 = vst [vmem:[#allocation5 + $0x158] sm:$0xff] %v886
    %951 = vst [vmem:[#allocation5 + $0x160] sm:$0xff] %v887
    %952 = vst [vmem:[#allocation5 + $0x168] sm:$0xff] %v888
    %953 = vst [vmem:[#allocation5 + $0x170] sm:$0xff] %v889
    %954 = vst [vmem:[#allocation5 + $0x178] sm:$0xff] %v890
    %955 = vst [vmem:[#allocation5 + $0x180] sm:$0xff] %v891
    %956 = vst [vmem:[#allocation5 + $0x188] sm:$0xff] %v892
    %957 = vst [vmem:[#allocation5 + $0x190] sm:$0xff] %v893
    %958 = vst [vmem:[#allocation5 + $0x198] sm:$0xff] %v894
    %959 = vst [vmem:[#allocation5 + $0x1a0] sm:$0xff] %v895
    %960 = vst [vmem:[#allocation5 + $0x1a8] sm:$0xff] %v896
    %961 = vst [vmem:[#allocation5 + $0x1b0] sm:$0xff] %v897
    %962 = vst [vmem:[#allocation5 + $0x1b8] sm:$0xff] %v898
    %963 = vst [vmem:[#allocation5 + $0x1c0] sm:$0xff] %v899
    %964 = vst [vmem:[#allocation5 + $0x1c8] sm:$0xff] %v900
    %965 = vst [vmem:[#allocation5 + $0x1d0] sm:$0xff] %v901
    %966 = vst [vmem:[#allocation5 + $0x1d8] sm:$0xff] %v902
    %967 = vst [vmem:[#allocation5 + $0x1e0] sm:$0xff] %v903
    %968 = vst [vmem:[#allocation5 + $0x1e8] sm:$0xff] %v904
    %969 = vst [vmem:[#allocation5 + $0x1f0] sm:$0xff] %v905
    %970 = vst [vmem:[#allocation5 + $0x1f8] sm:$0xff] %v906
    // Predicated region
    $region26: #{tpu_custom_call.1} parent=1 // pred_check
      _
    $region27: #{tpu_custom_call.1} parent=1 // pred_check_branch
      %972 = sbr.rel (0) target = $region29
    $region28: #{tpu_custom_call.1} parent=1 // pred_region
      %974 = vsyncadd [#allocation4], 0
      %s975 = sshll.u32 [#allocation5], 4
      %s976 = int_to_ptr.vmem [resolvable:$true] %s975
      %s977 = sshll.u32 %s5, 4
      %s978 = int_to_ptr.hbm [resolvable:$true] %s977
      %983 = dma.vmem_to_hbm [thread:$0]  %s976, 8192, %s978, [#allocation4], 256, 256, 16
    $region29: #{tpu_custom_call.1} parent=1 // pred_fallthru
      _
    // Predicated region
    $region30: #{tpu_custom_call.1} parent=1 // pred_check
      _
    $region31: #{tpu_custom_call.1} parent=1 // pred_check_branch
      %985 = sbr.rel (0) target = $region33
    $region32: #{tpu_custom_call.1} parent=1 // pred_region
      %987 = dma.done [#allocation4], 8192
    $region33: #{tpu_custom_call.1} parent=1 // pred_fallthru
      _
    %988 = vsyncpa [#allocation3], 1
    %989 = vsyncpa [#allocation4], 1

</llo_original>
